<compile_context>
chip_gen: v6e
topology: v6e:2x2x1
jax: 0.10.0
libtpu: 0.0.40
codegen_flags: <defaults>
</compile_context>

<pallas_src>
import jax
import jax.numpy as jnp
from jax.experimental import pallas as pl
from jax.experimental.pallas import tpu as pltpu

_SMALL_BYPASS_BYTES = 256 * 1024


def _h_swish_jnp(x):
    """Plain-jnp hard-swish (small-size bypass and the <128-element tail)."""
    xf = x.astype(jnp.float32)
    hs = jnp.clip(xf + 3.0, 0.0, 6.0) / 6.0
    return (xf * hs).astype(x.dtype)


def _h_swish_kernel(x_ref, o_ref):
    x = x_ref[...].astype(jnp.float32)
    hs = jnp.clip(x + 3.0, 0.0, 6.0) / 6.0   # relu6(x + 3) / 6
    o_ref[...] = (x * hs).astype(o_ref.dtype)


def _vmem_budget():
    """Return (tile_bytes, vmem_limit_bytes or None) for this TPU generation."""
    try:
        cap = getattr(pltpu.get_tpu_info(), "vmem_capacity_bytes", None)
    except Exception:
        cap = None
    if cap is None:
        # Unknown generation: 3 MiB tiles (12 MiB of pipeline buffers) and a
        # 32 MiB scoped limit — safe on every generation (>= 64 MiB physical).
        return 3 * 1024 * 1024, 32 * 1024 * 1024
    if cap >= 100 * 1024 * 1024:
        # v5e / v6e: 128 MiB physical VMEM. 8 MiB tiles -> 32 MiB of pipeline
        # buffers; raise scoped limit to 64 MiB for Mosaic scratch headroom.
        return 8 * 1024 * 1024, 64 * 1024 * 1024
    # v7x: 64 MiB per TensorCore, 32 MiB default scoped limit. 4 MiB tiles ->
    # 16 MiB of buffers per core, within the default limit even with both TCs.
    return 4 * 1024 * 1024, None


def h_swish(x: jax.Array) -> jax.Array:
    """Elementwise hard-swish matching the PyTorch h_swish module."""
    orig_shape = x.shape
    dtype = x.dtype
    n = x.size
    itemsize = jnp.dtype(dtype).itemsize

    # Tiny activations: skip pallas_call (launch/grid overhead dominates).
    if n * itemsize < _SMALL_BYPASS_BYTES or n < 128:
        return _h_swish_jnp(x)

    xf = x.reshape(-1)
    n_main = (n // 128) * 128
    tail = n - n_main  # < 128 elements, handled with plain jnp below.

    # Widest lane width: any multiple of 128 up to 4096 that divides n_main.
    W = 128
    for k in range(32, 0, -1):
        if n_main % (128 * k) == 0:
            W = 128 * k
            break

    x_main = xf[:n_main] if tail else xf
    x2d = x_main.reshape(n_main // W, W)
    rows = x2d.shape[0]

    tile_bytes, vmem_limit = _vmem_budget()
    sub = max(8, 32 // itemsize)  # sublane packing: 8 f32 / 16 bf16 / 32 int8
    target_rows = max(sub, (tile_bytes // (W * itemsize)) // sub * sub)

    if rows <= target_rows:
        block_rows = rows          # single block == full array dims (always legal)
    else:
        block_rows = target_rows   # multiple of `sub`; edge block is partial

    grid = (pl.cdiv(rows, block_rows),)

    cp_kwargs = dict(dimension_semantics=("parallel",))
    if vmem_limit is not None:
        cp_kwargs["vmem_limit_bytes"] = vmem_limit

    out2d = pl.pallas_call(
        _h_swish_kernel,
        out_shape=jax.ShapeDtypeStruct(x2d.shape, dtype),
        grid=grid,
        in_specs=[pl.BlockSpec((block_rows, W), lambda i: (i, 0))],
        out_specs=pl.BlockSpec((block_rows, W), lambda i: (i, 0)),
        compiler_params=pltpu.CompilerParams(**cp_kwargs),
        cost_estimate=pl.CostEstimate(
            flops=4 * n_main,
            transcendentals=0,
            bytes_accessed=2 * n_main * itemsize,
        ),
    )(x2d)

    out_flat = out2d.reshape(-1)
    if tail:
        out_flat = jnp.concatenate([out_flat, _h_swish_jnp(xf[n_main:])])
    return out_flat.reshape(orig_shape)


if __name__ == "__main__":
    key = jax.random.PRNGKey(0)
    k1, k2, k3 = jax.random.split(key, 3)

    # Small NCHW activation consistent with the module (fused-XLA bypass path).
    x_small = jax.random.normal(k1, (2, 4, 16, 16), dtype=jnp.float32) * 4.0
    # Larger activation that runs through the Pallas kernel (128-divisible).
    x_big = jax.random.normal(k2, (2, 64, 32, 32), dtype=jnp.float32) * 4.0
    # Element count not divisible by 128 (aligned-prefix kernel + jnp tail).
    x_odd = jax.random.normal(k3, (3, 96, 17, 17), dtype=jnp.float32) * 4.0

    for xin in (x_small, x_big, x_odd):
        y = jax.block_until_ready(h_swish(xin))
        y_ref = _h_swish_jnp(xin)
        assert y.shape == xin.shape and y.dtype == xin.dtype
        assert jnp.allclose(y, y_ref, atol=1e-6, rtol=1e-6), "mismatch vs reference"

    print("KERNEL_OK")
</pallas_src>

<mosaic_0001>
module attributes {stable_mosaic.version = 11 : i64} {
  func.func @_h_swish_kernel(%arg0: i32, %arg1: memref<32x4096xf32, #tpu.memory_space<vmem>>, %arg2: memref<32x4096xf32, #tpu.memory_space<vmem>>) attributes {dimension_semantics = [#tpu.dimension_semantics<parallel>], iteration_bounds = array<i64: 1>, scalar_prefetch = 0 : i64, scratch_operands = 0 : i64, tpu.core_type = #tpu.core_type<tc>, window_params = [{transform_indices = @transform_0, window_bounds = array<i64: 32, 4096>}, {transform_indices = @transform_1, window_bounds = array<i64: 32, 4096>}]} {
    %c0 = arith.constant 0 : index
    %c0_0 = arith.constant 0 : index
    %0 = vector.load %arg1[%c0, %c0_0] : memref<32x4096xf32, #tpu.memory_space<vmem>>, vector<32x4096xf32>
    %cst = arith.constant 3.000000e+00 : f32
    %1 = vector.broadcast %cst : f32 to vector<32x4096xf32>
    %2 = arith.addf %0, %1 : vector<32x4096xf32>
    %cst_1 = arith.constant 0.000000e+00 : f32
    %cst_2 = arith.constant 6.000000e+00 : f32
    %3 = vector.broadcast %cst_1 : f32 to vector<32x4096xf32>
    %4 = arith.maximumf %3, %2 : vector<32x4096xf32>
    %5 = vector.broadcast %cst_2 : f32 to vector<32x4096xf32>
    %6 = arith.minimumf %5, %4 : vector<32x4096xf32>
    %cst_3 = arith.constant 6.000000e+00 : f32
    %7 = vector.broadcast %cst_3 : f32 to vector<32x4096xf32>
    %8 = arith.divf %6, %7 : vector<32x4096xf32>
    %9 = arith.mulf %0, %8 : vector<32x4096xf32>
    %c0_4 = arith.constant 0 : index
    %c0_5 = arith.constant 0 : index
    %10 = vector.load %arg2[%c0_4, %c0_5] : memref<32x4096xf32, #tpu.memory_space<vmem>>, vector<32x4096xf32>
    tpu.vector_store %arg2[%c0_4, %c0_5], %9 {strides = array<i32>} : memref<32x4096xf32, #tpu.memory_space<vmem>>, vector<32x4096xf32>,
    return
  }
  func.func @transform_0(%arg0: i32) -> (i32, i32) {
    %c0_i32 = arith.constant 0 : i32
    %c0_i32_0 = arith.constant 0 : i32
    return %arg0, %c0_i32 : i32, i32
  }
  func.func @transform_1(%arg0: i32) -> (i32, i32) {
    %c0_i32 = arith.constant 0 : i32
    %c0_i32_0 = arith.constant 0 : i32
    return %arg0, %c0_i32 : i32, i32
  }
}

</mosaic_0001>

<llo_original>
// kernel: tpu_custom_call.1
$region0: #{tpu_custom_call.1}
  #allocation0 [shape = 'u32[]', space=smem, size = 0x4, offset = 0x4, fixed_abs, tag = 'smem constant byte address 0x4 - core index']
  #allocation1 [shape = 'u32[144,128]{1,0:T(1,128)}', space=vmem, size = 0x12000, scoped, tag = 'internal scratch']
  %s0 = inlined_call_operand.hbm [shape: f32[32,4096], index: 0, kind: input, shape index: {}]
  %s1 = inlined_call_operand.hbm [shape: f32[32,4096], index: 1, kind: output, shape index: {}]
  %s2 = sld [smem:[#allocation0]]
  $region18: #{tpu_custom_call.1} parent=0
    _
  %s4 = ssub.s32 1, %s2
  %s5 = scalar_select 0, %s4, %s2
  $region1: #{tpu_custom_call.1} parent=0
    #allocation2 [shape = 'u8[524288]{0}', space=vmem, size = 0x80000, scoped, tag = 'input window, operand 0, single buffered']
    #allocation3 [shape = 's32[1]{0}', space=sflag, size = 0x4, scoped, tag = 'scoped memory for tpu_custom_call.1']
    #allocation4 [shape = 's32[1]{0}', space=sflag, size = 0x4, scoped, tag = 'scoped memory for tpu_custom_call.1']
    #allocation5 [shape = 'u8[524288]{0}', space=vmem, size = 0x80000, scoped, tag = 'output window, operand 0, single buffered']
    %6 = vsyncpa [#allocation3], 0
    %7 = vsyncpa [#allocation4], 0
    // Predicated region
    $region2: #{tpu_custom_call.1} parent=1 // pred_check
      _
    $region3: #{tpu_custom_call.1} parent=1 // pred_check_branch
      %9 = sbr.rel (0) target = $region5
    $region4: #{tpu_custom_call.1} parent=1 // pred_region
      %s11 = ssub.s32 16384, 16384
      %12 = vsyncadd [#allocation3], %s11
      %s13 = sshll.u32 [#allocation2], 4
      %s14 = int_to_ptr.vmem [resolvable:$true] %s13
      %19 = dma.hbm_to_vmem [thread:$0]  %s0, 16384, %s14, [#allocation3], 4096, 4096, 256
    $region5: #{tpu_custom_call.1} parent=1 // pred_fallthru
      _
    // Predicated region
    $region6: #{tpu_custom_call.1} parent=1 // pred_check
      _
    $region7: #{tpu_custom_call.1} parent=1 // pred_check_branch
      %21 = sbr.rel (0) target = $region9
    $region8: #{tpu_custom_call.1} parent=1 // pred_region
      %22 = dma.done [#allocation3], 16384
    $region9: #{tpu_custom_call.1} parent=1 // pred_fallthru
      _
    %v23 = vld [vmem:[#allocation2] sm:$0xff]
    %v24 = vld [vmem:[#allocation2 + $0x8] sm:$0xff]
    %v25 = vld [vmem:[#allocation2 + $0x10] sm:$0xff]
    %v26 = vld [vmem:[#allocation2 + $0x18] sm:$0xff]
    %v27 = vld [vmem:[#allocation2 + $0x20] sm:$0xff]
    %v28 = vld [vmem:[#allocation2 + $0x28] sm:$0xff]
    %v29 = vld [vmem:[#allocation2 + $0x30] sm:$0xff]
    %v30 = vld [vmem:[#allocation2 + $0x38] sm:$0xff]
    %v31 = vld [vmem:[#allocation2 + $0x40] sm:$0xff]
    %v32 = vld [vmem:[#allocation2 + $0x48] sm:$0xff]
    %v33 = vld [vmem:[#allocation2 + $0x50] sm:$0xff]
    %v34 = vld [vmem:[#allocation2 + $0x58] sm:$0xff]
    %v35 = vld [vmem:[#allocation2 + $0x60] sm:$0xff]
    %v36 = vld [vmem:[#allocation2 + $0x68] sm:$0xff]
    %v37 = vld [vmem:[#allocation2 + $0x70] sm:$0xff]
    %v38 = vld [vmem:[#allocation2 + $0x78] sm:$0xff]
    %v39 = vld [vmem:[#allocation2 + $0x80] sm:$0xff]
    %v40 = vld [vmem:[#allocation2 + $0x88] sm:$0xff]
    %v41 = vld [vmem:[#allocation2 + $0x90] sm:$0xff]
    %v42 = vld [vmem:[#allocation2 + $0x98] sm:$0xff]
    %v43 = vld [vmem:[#allocation2 + $0xa0] sm:$0xff]
    %v44 = vld [vmem:[#allocation2 + $0xa8] sm:$0xff]
    %v45 = vld [vmem:[#allocation2 + $0xb0] sm:$0xff]
    %v46 = vld [vmem:[#allocation2 + $0xb8] sm:$0xff]
    %v47 = vld [vmem:[#allocation2 + $0xc0] sm:$0xff]
    %v48 = vld [vmem:[#allocation2 + $0xc8] sm:$0xff]
    %v49 = vld [vmem:[#allocation2 + $0xd0] sm:$0xff]
    %v50 = vld [vmem:[#allocation2 + $0xd8] sm:$0xff]
    %v51 = vld [vmem:[#allocation2 + $0xe0] sm:$0xff]
    %v52 = vld [vmem:[#allocation2 + $0xe8] sm:$0xff]
    %v53 = vld [vmem:[#allocation2 + $0xf0] sm:$0xff]
    %v54 = vld [vmem:[#allocation2 + $0xf8] sm:$0xff]
    %v55 = vld [vmem:[#allocation2 + $0x100] sm:$0xff]
    %v56 = vld [vmem:[#allocation2 + $0x108] sm:$0xff]
    %v57 = vld [vmem:[#allocation2 + $0x110] sm:$0xff]
    %v58 = vld [vmem:[#allocation2 + $0x118] sm:$0xff]
    %v59 = vld [vmem:[#allocation2 + $0x120] sm:$0xff]
    %v60 = vld [vmem:[#allocation2 + $0x128] sm:$0xff]
    %v61 = vld [vmem:[#allocation2 + $0x130] sm:$0xff]
    %v62 = vld [vmem:[#allocation2 + $0x138] sm:$0xff]
    %v63 = vld [vmem:[#allocation2 + $0x140] sm:$0xff]
    %v64 = vld [vmem:[#allocation2 + $0x148] sm:$0xff]
    %v65 = vld [vmem:[#allocation2 + $0x150] sm:$0xff]
    %v66 = vld [vmem:[#allocation2 + $0x158] sm:$0xff]
    %v67 = vld [vmem:[#allocation2 + $0x160] sm:$0xff]
    %v68 = vld [vmem:[#allocation2 + $0x168] sm:$0xff]
    %v69 = vld [vmem:[#allocation2 + $0x170] sm:$0xff]
    %v70 = vld [vmem:[#allocation2 + $0x178] sm:$0xff]
    %v71 = vld [vmem:[#allocation2 + $0x180] sm:$0xff]
    %v72 = vld [vmem:[#allocation2 + $0x188] sm:$0xff]
    %v73 = vld [vmem:[#allocation2 + $0x190] sm:$0xff]
    %v74 = vld [vmem:[#allocation2 + $0x198] sm:$0xff]
    %v75 = vld [vmem:[#allocation2 + $0x1a0] sm:$0xff]
    %v76 = vld [vmem:[#allocation2 + $0x1a8] sm:$0xff]
    %v77 = vld [vmem:[#allocation2 + $0x1b0] sm:$0xff]
    %v78 = vld [vmem:[#allocation2 + $0x1b8] sm:$0xff]
    %v79 = vld [vmem:[#allocation2 + $0x1c0] sm:$0xff]
    %v80 = vld [vmem:[#allocation2 + $0x1c8] sm:$0xff]
    %v81 = vld [vmem:[#allocation2 + $0x1d0] sm:$0xff]
    %v82 = vld [vmem:[#allocation2 + $0x1d8] sm:$0xff]
    %v83 = vld [vmem:[#allocation2 + $0x1e0] sm:$0xff]
    %v84 = vld [vmem:[#allocation2 + $0x1e8] sm:$0xff]
    %v85 = vld [vmem:[#allocation2 + $0x1f0] sm:$0xff]
    %v86 = vld [vmem:[#allocation2 + $0x1f8] sm:$0xff]
    %v87 = vld [vmem:[#allocation2 + $0x200] sm:$0xff]
    %v88 = vld [vmem:[#allocation2 + $0x208] sm:$0xff]
    %v89 = vld [vmem:[#allocation2 + $0x210] sm:$0xff]
    %v90 = vld [vmem:[#allocation2 + $0x218] sm:$0xff]
    %v91 = vld [vmem:[#allocation2 + $0x220] sm:$0xff]
    %v92 = vld [vmem:[#allocation2 + $0x228] sm:$0xff]
    %v93 = vld [vmem:[#allocation2 + $0x230] sm:$0xff]
    %v94 = vld [vmem:[#allocation2 + $0x238] sm:$0xff]
    %v95 = vld [vmem:[#allocation2 + $0x240] sm:$0xff]
    %v96 = vld [vmem:[#allocation2 + $0x248] sm:$0xff]
    %v97 = vld [vmem:[#allocation2 + $0x250] sm:$0xff]
    %v98 = vld [vmem:[#allocation2 + $0x258] sm:$0xff]
    %v99 = vld [vmem:[#allocation2 + $0x260] sm:$0xff]
    %v100 = vld [vmem:[#allocation2 + $0x268] sm:$0xff]
    %v101 = vld [vmem:[#allocation2 + $0x270] sm:$0xff]
    %v102 = vld [vmem:[#allocation2 + $0x278] sm:$0xff]
    %v103 = vld [vmem:[#allocation2 + $0x280] sm:$0xff]
    %v104 = vld [vmem:[#allocation2 + $0x288] sm:$0xff]
    %v105 = vld [vmem:[#allocation2 + $0x290] sm:$0xff]
    %v106 = vld [vmem:[#allocation2 + $0x298] sm:$0xff]
    %v107 = vld [vmem:[#allocation2 + $0x2a0] sm:$0xff]
    %v108 = vld [vmem:[#allocation2 + $0x2a8] sm:$0xff]
    %v109 = vld [vmem:[#allocation2 + $0x2b0] sm:$0xff]
    %v110 = vld [vmem:[#allocation2 + $0x2b8] sm:$0xff]
    %v111 = vld [vmem:[#allocation2 + $0x2c0] sm:$0xff]
    %v112 = vld [vmem:[#allocation2 + $0x2c8] sm:$0xff]
    %v113 = vld [vmem:[#allocation2 + $0x2d0] sm:$0xff]
    %v114 = vld [vmem:[#allocation2 + $0x2d8] sm:$0xff]
    %v115 = vld [vmem:[#allocation2 + $0x2e0] sm:$0xff]
    %v116 = vld [vmem:[#allocation2 + $0x2e8] sm:$0xff]
    %v117 = vld [vmem:[#allocation2 + $0x2f0] sm:$0xff]
    %v118 = vld [vmem:[#allocation2 + $0x2f8] sm:$0xff]
    %v119 = vld [vmem:[#allocation2 + $0x300] sm:$0xff]
    %v120 = vld [vmem:[#allocation2 + $0x308] sm:$0xff]
    %v121 = vld [vmem:[#allocation2 + $0x310] sm:$0xff]
    %v122 = vld [vmem:[#allocation2 + $0x318] sm:$0xff]
    %v123 = vld [vmem:[#allocation2 + $0x320] sm:$0xff]
    %v124 = vld [vmem:[#allocation2 + $0x328] sm:$0xff]
    %v125 = vld [vmem:[#allocation2 + $0x330] sm:$0xff]
    %v126 = vld [vmem:[#allocation2 + $0x338] sm:$0xff]
    %v127 = vld [vmem:[#allocation2 + $0x340] sm:$0xff]
    %v128 = vld [vmem:[#allocation2 + $0x348] sm:$0xff]
    %v129 = vld [vmem:[#allocation2 + $0x350] sm:$0xff]
    %v130 = vld [vmem:[#allocation2 + $0x358] sm:$0xff]
    %v131 = vld [vmem:[#allocation2 + $0x360] sm:$0xff]
    %v132 = vld [vmem:[#allocation2 + $0x368] sm:$0xff]
    %v133 = vld [vmem:[#allocation2 + $0x370] sm:$0xff]
    %v134 = vld [vmem:[#allocation2 + $0x378] sm:$0xff]
    %v135 = vld [vmem:[#allocation2 + $0x380] sm:$0xff]
    %v136 = vld [vmem:[#allocation2 + $0x388] sm:$0xff]
    %v137 = vld [vmem:[#allocation2 + $0x390] sm:$0xff]
    %v138 = vld [vmem:[#allocation2 + $0x398] sm:$0xff]
    %v139 = vld [vmem:[#allocation2 + $0x3a0] sm:$0xff]
    %v140 = vld [vmem:[#allocation2 + $0x3a8] sm:$0xff]
    %v141 = vld [vmem:[#allocation2 + $0x3b0] sm:$0xff]
    %v142 = vld [vmem:[#allocation2 + $0x3b8] sm:$0xff]
    %v143 = vld [vmem:[#allocation2 + $0x3c0] sm:$0xff]
    %v144 = vld [vmem:[#allocation2 + $0x3c8] sm:$0xff]
    %v145 = vld [vmem:[#allocation2 + $0x3d0] sm:$0xff]
    %v146 = vld [vmem:[#allocation2 + $0x3d8] sm:$0xff]
    %v147 = vld [vmem:[#allocation2 + $0x3e0] sm:$0xff]
    %v148 = vld [vmem:[#allocation2 + $0x3e8] sm:$0xff]
    %v149 = vld [vmem:[#allocation2 + $0x3f0] sm:$0xff]
    %v150 = vld [vmem:[#allocation2 + $0x3f8] sm:$0xff]
    %v151 = vadd.f32 %v23, 3.0
    %v152 = vadd.f32 %v24, 3.0
    %v153 = vadd.f32 %v25, 3.0
    %v154 = vadd.f32 %v26, 3.0
    %v155 = vadd.f32 %v27, 3.0
    %v156 = vadd.f32 %v28, 3.0
    %v157 = vadd.f32 %v29, 3.0
    %v158 = vadd.f32 %v30, 3.0
    %v159 = vadd.f32 %v31, 3.0
    %v160 = vadd.f32 %v32, 3.0
    %v161 = vadd.f32 %v33, 3.0
    %v162 = vadd.f32 %v34, 3.0
    %v163 = vadd.f32 %v35, 3.0
    %v164 = vadd.f32 %v36, 3.0
    %v165 = vadd.f32 %v37, 3.0
    %v166 = vadd.f32 %v38, 3.0
    %v167 = vadd.f32 %v39, 3.0
    %v168 = vadd.f32 %v40, 3.0
    %v169 = vadd.f32 %v41, 3.0
    %v170 = vadd.f32 %v42, 3.0
    %v171 = vadd.f32 %v43, 3.0
    %v172 = vadd.f32 %v44, 3.0
    %v173 = vadd.f32 %v45, 3.0
    %v174 = vadd.f32 %v46, 3.0
    %v175 = vadd.f32 %v47, 3.0
    %v176 = vadd.f32 %v48, 3.0
    %v177 = vadd.f32 %v49, 3.0
    %v178 = vadd.f32 %v50, 3.0
    %v179 = vadd.f32 %v51, 3.0
    %v180 = vadd.f32 %v52, 3.0
    %v181 = vadd.f32 %v53, 3.0
    %v182 = vadd.f32 %v54, 3.0
    %v183 = vadd.f32 %v55, 3.0
    %v184 = vadd.f32 %v56, 3.0
    %v185 = vadd.f32 %v57, 3.0
    %v186 = vadd.f32 %v58, 3.0
    %v187 = vadd.f32 %v59, 3.0
    %v188 = vadd.f32 %v60, 3.0
    %v189 = vadd.f32 %v61, 3.0
    %v190 = vadd.f32 %v62, 3.0
    %v191 = vadd.f32 %v63, 3.0
    %v192 = vadd.f32 %v64, 3.0
    %v193 = vadd.f32 %v65, 3.0
    %v194 = vadd.f32 %v66, 3.0
    %v195 = vadd.f32 %v67, 3.0
    %v196 = vadd.f32 %v68, 3.0
    %v197 = vadd.f32 %v69, 3.0
    %v198 = vadd.f32 %v70, 3.0
    %v199 = vadd.f32 %v71, 3.0
    %v200 = vadd.f32 %v72, 3.0
    %v201 = vadd.f32 %v73, 3.0
    %v202 = vadd.f32 %v74, 3.0
    %v203 = vadd.f32 %v75, 3.0
    %v204 = vadd.f32 %v76, 3.0
    %v205 = vadd.f32 %v77, 3.0
    %v206 = vadd.f32 %v78, 3.0
    %v207 = vadd.f32 %v79, 3.0
    %v208 = vadd.f32 %v80, 3.0
    %v209 = vadd.f32 %v81, 3.0
    %v210 = vadd.f32 %v82, 3.0
    %v211 = vadd.f32 %v83, 3.0
    %v212 = vadd.f32 %v84, 3.0
    %v213 = vadd.f32 %v85, 3.0
    %v214 = vadd.f32 %v86, 3.0
    %v215 = vadd.f32 %v87, 3.0
    %v216 = vadd.f32 %v88, 3.0
    %v217 = vadd.f32 %v89, 3.0
    %v218 = vadd.f32 %v90, 3.0
    %v219 = vadd.f32 %v91, 3.0
    %v220 = vadd.f32 %v92, 3.0
    %v221 = vadd.f32 %v93, 3.0
    %v222 = vadd.f32 %v94, 3.0
    %v223 = vadd.f32 %v95, 3.0
    %v224 = vadd.f32 %v96, 3.0
    %v225 = vadd.f32 %v97, 3.0
    %v226 = vadd.f32 %v98, 3.0
    %v227 = vadd.f32 %v99, 3.0
    %v228 = vadd.f32 %v100, 3.0
    %v229 = vadd.f32 %v101, 3.0
    %v230 = vadd.f32 %v102, 3.0
    %v231 = vadd.f32 %v103, 3.0
    %v232 = vadd.f32 %v104, 3.0
    %v233 = vadd.f32 %v105, 3.0
    %v234 = vadd.f32 %v106, 3.0
    %v235 = vadd.f32 %v107, 3.0
    %v236 = vadd.f32 %v108, 3.0
    %v237 = vadd.f32 %v109, 3.0
    %v238 = vadd.f32 %v110, 3.0
    %v239 = vadd.f32 %v111, 3.0
    %v240 = vadd.f32 %v112, 3.0
    %v241 = vadd.f32 %v113, 3.0
    %v242 = vadd.f32 %v114, 3.0
    %v243 = vadd.f32 %v115, 3.0
    %v244 = vadd.f32 %v116, 3.0
    %v245 = vadd.f32 %v117, 3.0
    %v246 = vadd.f32 %v118, 3.0
    %v247 = vadd.f32 %v119, 3.0
    %v248 = vadd.f32 %v120, 3.0
    %v249 = vadd.f32 %v121, 3.0
    %v250 = vadd.f32 %v122, 3.0
    %v251 = vadd.f32 %v123, 3.0
    %v252 = vadd.f32 %v124, 3.0
    %v253 = vadd.f32 %v125, 3.0
    %v254 = vadd.f32 %v126, 3.0
    %v255 = vadd.f32 %v127, 3.0
    %v256 = vadd.f32 %v128, 3.0
    %v257 = vadd.f32 %v129, 3.0
    %v258 = vadd.f32 %v130, 3.0
    %v259 = vadd.f32 %v131, 3.0
    %v260 = vadd.f32 %v132, 3.0
    %v261 = vadd.f32 %v133, 3.0
    %v262 = vadd.f32 %v134, 3.0
    %v263 = vadd.f32 %v135, 3.0
    %v264 = vadd.f32 %v136, 3.0
    %v265 = vadd.f32 %v137, 3.0
    %v266 = vadd.f32 %v138, 3.0
    %v267 = vadd.f32 %v139, 3.0
    %v268 = vadd.f32 %v140, 3.0
    %v269 = vadd.f32 %v141, 3.0
    %v270 = vadd.f32 %v142, 3.0
    %v271 = vadd.f32 %v143, 3.0
    %v272 = vadd.f32 %v144, 3.0
    %v273 = vadd.f32 %v145, 3.0
    %v274 = vadd.f32 %v146, 3.0
    %v275 = vadd.f32 %v147, 3.0
    %v276 = vadd.f32 %v148, 3.0
    %v277 = vadd.f32 %v149, 3.0
    %v278 = vadd.f32 %v150, 3.0
    %v279 = vmax.f32 %v151, 0.0
    %v280 = vmax.f32 %v152, 0.0
    %v281 = vmax.f32 %v153, 0.0
    %v282 = vmax.f32 %v154, 0.0
    %v283 = vmax.f32 %v155, 0.0
    %v284 = vmax.f32 %v156, 0.0
    %v285 = vmax.f32 %v157, 0.0
    %v286 = vmax.f32 %v158, 0.0
    %v287 = vmax.f32 %v159, 0.0
    %v288 = vmax.f32 %v160, 0.0
    %v289 = vmax.f32 %v161, 0.0
    %v290 = vmax.f32 %v162, 0.0
    %v291 = vmax.f32 %v163, 0.0
    %v292 = vmax.f32 %v164, 0.0
    %v293 = vmax.f32 %v165, 0.0
    %v294 = vmax.f32 %v166, 0.0
    %v295 = vmax.f32 %v167, 0.0
    %v296 = vmax.f32 %v168, 0.0
    %v297 = vmax.f32 %v169, 0.0
    %v298 = vmax.f32 %v170, 0.0
    %v299 = vmax.f32 %v171, 0.0
    %v300 = vmax.f32 %v172, 0.0
    %v301 = vmax.f32 %v173, 0.0
    %v302 = vmax.f32 %v174, 0.0
    %v303 = vmax.f32 %v175, 0.0
    %v304 = vmax.f32 %v176, 0.0
    %v305 = vmax.f32 %v177, 0.0
    %v306 = vmax.f32 %v178, 0.0
    %v307 = vmax.f32 %v179, 0.0
    %v308 = vmax.f32 %v180, 0.0
    %v309 = vmax.f32 %v181, 0.0
    %v310 = vmax.f32 %v182, 0.0
    %v311 = vmax.f32 %v183, 0.0
    %v312 = vmax.f32 %v184, 0.0
    %v313 = vmax.f32 %v185, 0.0
    %v314 = vmax.f32 %v186, 0.0
    %v315 = vmax.f32 %v187, 0.0
    %v316 = vmax.f32 %v188, 0.0
    %v317 = vmax.f32 %v189, 0.0
    %v318 = vmax.f32 %v190, 0.0
    %v319 = vmax.f32 %v191, 0.0
    %v320 = vmax.f32 %v192, 0.0
    %v321 = vmax.f32 %v193, 0.0
    %v322 = vmax.f32 %v194, 0.0
    %v323 = vmax.f32 %v195, 0.0
    %v324 = vmax.f32 %v196, 0.0
    %v325 = vmax.f32 %v197, 0.0
    %v326 = vmax.f32 %v198, 0.0
    %v327 = vmax.f32 %v199, 0.0
    %v328 = vmax.f32 %v200, 0.0
    %v329 = vmax.f32 %v201, 0.0
    %v330 = vmax.f32 %v202, 0.0
    %v331 = vmax.f32 %v203, 0.0
    %v332 = vmax.f32 %v204, 0.0
    %v333 = vmax.f32 %v205, 0.0
    %v334 = vmax.f32 %v206, 0.0
    %v335 = vmax.f32 %v207, 0.0
    %v336 = vmax.f32 %v208, 0.0
    %v337 = vmax.f32 %v209, 0.0
    %v338 = vmax.f32 %v210, 0.0
    %v339 = vmax.f32 %v211, 0.0
    %v340 = vmax.f32 %v212, 0.0
    %v341 = vmax.f32 %v213, 0.0
    %v342 = vmax.f32 %v214, 0.0
    %v343 = vmax.f32 %v215, 0.0
    %v344 = vmax.f32 %v216, 0.0
    %v345 = vmax.f32 %v217, 0.0
    %v346 = vmax.f32 %v218, 0.0
    %v347 = vmax.f32 %v219, 0.0
    %v348 = vmax.f32 %v220, 0.0
    %v349 = vmax.f32 %v221, 0.0
    %v350 = vmax.f32 %v222, 0.0
    %v351 = vmax.f32 %v223, 0.0
    %v352 = vmax.f32 %v224, 0.0
    %v353 = vmax.f32 %v225, 0.0
    %v354 = vmax.f32 %v226, 0.0
    %v355 = vmax.f32 %v227, 0.0
    %v356 = vmax.f32 %v228, 0.0
    %v357 = vmax.f32 %v229, 0.0
    %v358 = vmax.f32 %v230, 0.0
    %v359 = vmax.f32 %v231, 0.0
    %v360 = vmax.f32 %v232, 0.0
    %v361 = vmax.f32 %v233, 0.0
    %v362 = vmax.f32 %v234, 0.0
    %v363 = vmax.f32 %v235, 0.0
    %v364 = vmax.f32 %v236, 0.0
    %v365 = vmax.f32 %v237, 0.0
    %v366 = vmax.f32 %v238, 0.0
    %v367 = vmax.f32 %v239, 0.0
    %v368 = vmax.f32 %v240, 0.0
    %v369 = vmax.f32 %v241, 0.0
    %v370 = vmax.f32 %v242, 0.0
    %v371 = vmax.f32 %v243, 0.0
    %v372 = vmax.f32 %v244, 0.0
    %v373 = vmax.f32 %v245, 0.0
    %v374 = vmax.f32 %v246, 0.0
    %v375 = vmax.f32 %v247, 0.0
    %v376 = vmax.f32 %v248, 0.0
    %v377 = vmax.f32 %v249, 0.0
    %v378 = vmax.f32 %v250, 0.0
    %v379 = vmax.f32 %v251, 0.0
    %v380 = vmax.f32 %v252, 0.0
    %v381 = vmax.f32 %v253, 0.0
    %v382 = vmax.f32 %v254, 0.0
    %v383 = vmax.f32 %v255, 0.0
    %v384 = vmax.f32 %v256, 0.0
    %v385 = vmax.f32 %v257, 0.0
    %v386 = vmax.f32 %v258, 0.0
    %v387 = vmax.f32 %v259, 0.0
    %v388 = vmax.f32 %v260, 0.0
    %v389 = vmax.f32 %v261, 0.0
    %v390 = vmax.f32 %v262, 0.0
    %v391 = vmax.f32 %v263, 0.0
    %v392 = vmax.f32 %v264, 0.0
    %v393 = vmax.f32 %v265, 0.0
    %v394 = vmax.f32 %v266, 0.0
    %v395 = vmax.f32 %v267, 0.0
    %v396 = vmax.f32 %v268, 0.0
    %v397 = vmax.f32 %v269, 0.0
    %v398 = vmax.f32 %v270, 0.0
    %v399 = vmax.f32 %v271, 0.0
    %v400 = vmax.f32 %v272, 0.0
    %v401 = vmax.f32 %v273, 0.0
    %v402 = vmax.f32 %v274, 0.0
    %v403 = vmax.f32 %v275, 0.0
    %v404 = vmax.f32 %v276, 0.0
    %v405 = vmax.f32 %v277, 0.0
    %v406 = vmax.f32 %v278, 0.0
    %v407 = vmin.f32 %v279, 6.0
    %v408 = vmin.f32 %v280, 6.0
    %v409 = vmin.f32 %v281, 6.0
    %v410 = vmin.f32 %v282, 6.0
    %v411 = vmin.f32 %v283, 6.0
    %v412 = vmin.f32 %v284, 6.0
    %v413 = vmin.f32 %v285, 6.0
    %v414 = vmin.f32 %v286, 6.0
    %v415 = vmin.f32 %v287, 6.0
    %v416 = vmin.f32 %v288, 6.0
    %v417 = vmin.f32 %v289, 6.0
    %v418 = vmin.f32 %v290, 6.0
    %v419 = vmin.f32 %v291, 6.0
    %v420 = vmin.f32 %v292, 6.0
    %v421 = vmin.f32 %v293, 6.0
    %v422 = vmin.f32 %v294, 6.0
    %v423 = vmin.f32 %v295, 6.0
    %v424 = vmin.f32 %v296, 6.0
    %v425 = vmin.f32 %v297, 6.0
    %v426 = vmin.f32 %v298, 6.0
    %v427 = vmin.f32 %v299, 6.0
    %v428 = vmin.f32 %v300, 6.0
    %v429 = vmin.f32 %v301, 6.0
    %v430 = vmin.f32 %v302, 6.0
    %v431 = vmin.f32 %v303, 6.0
    %v432 = vmin.f32 %v304, 6.0
    %v433 = vmin.f32 %v305, 6.0
    %v434 = vmin.f32 %v306, 6.0
    %v435 = vmin.f32 %v307, 6.0
    %v436 = vmin.f32 %v308, 6.0
    %v437 = vmin.f32 %v309, 6.0
    %v438 = vmin.f32 %v310, 6.0
    %v439 = vmin.f32 %v311, 6.0
    %v440 = vmin.f32 %v312, 6.0
    %v441 = vmin.f32 %v313, 6.0
    %v442 = vmin.f32 %v314, 6.0
    %v443 = vmin.f32 %v315, 6.0
    %v444 = vmin.f32 %v316, 6.0
    %v445 = vmin.f32 %v317, 6.0
    %v446 = vmin.f32 %v318, 6.0
    %v447 = vmin.f32 %v319, 6.0
    %v448 = vmin.f32 %v320, 6.0
    %v449 = vmin.f32 %v321, 6.0
    %v450 = vmin.f32 %v322, 6.0
    %v451 = vmin.f32 %v323, 6.0
    %v452 = vmin.f32 %v324, 6.0
    %v453 = vmin.f32 %v325, 6.0
    %v454 = vmin.f32 %v326, 6.0
    %v455 = vmin.f32 %v327, 6.0
    %v456 = vmin.f32 %v328, 6.0
    %v457 = vmin.f32 %v329, 6.0
    %v458 = vmin.f32 %v330, 6.0
    %v459 = vmin.f32 %v331, 6.0
    %v460 = vmin.f32 %v332, 6.0
    %v461 = vmin.f32 %v333, 6.0
    %v462 = vmin.f32 %v334, 6.0
    %v463 = vmin.f32 %v335, 6.0
    %v464 = vmin.f32 %v336, 6.0
    %v465 = vmin.f32 %v337, 6.0
    %v466 = vmin.f32 %v338, 6.0
    %v467 = vmin.f32 %v339, 6.0
    %v468 = vmin.f32 %v340, 6.0
    %v469 = vmin.f32 %v341, 6.0
    %v470 = vmin.f32 %v342, 6.0
    %v471 = vmin.f32 %v343, 6.0
    %v472 = vmin.f32 %v344, 6.0
    %v473 = vmin.f32 %v345, 6.0
    %v474 = vmin.f32 %v346, 6.0
    %v475 = vmin.f32 %v347, 6.0
    %v476 = vmin.f32 %v348, 6.0
    %v477 = vmin.f32 %v349, 6.0
    %v478 = vmin.f32 %v350, 6.0
    %v479 = vmin.f32 %v351, 6.0
    %v480 = vmin.f32 %v352, 6.0
    %v481 = vmin.f32 %v353, 6.0
    %v482 = vmin.f32 %v354, 6.0
    %v483 = vmin.f32 %v355, 6.0
    %v484 = vmin.f32 %v356, 6.0
    %v485 = vmin.f32 %v357, 6.0
    %v486 = vmin.f32 %v358, 6.0
    %v487 = vmin.f32 %v359, 6.0
    %v488 = vmin.f32 %v360, 6.0
    %v489 = vmin.f32 %v361, 6.0
    %v490 = vmin.f32 %v362, 6.0
    %v491 = vmin.f32 %v363, 6.0
    %v492 = vmin.f32 %v364, 6.0
    %v493 = vmin.f32 %v365, 6.0
    %v494 = vmin.f32 %v366, 6.0
    %v495 = vmin.f32 %v367, 6.0
    %v496 = vmin.f32 %v368, 6.0
    %v497 = vmin.f32 %v369, 6.0
    %v498 = vmin.f32 %v370, 6.0
    %v499 = vmin.f32 %v371, 6.0
    %v500 = vmin.f32 %v372, 6.0
    %v501 = vmin.f32 %v373, 6.0
    %v502 = vmin.f32 %v374, 6.0
    %v503 = vmin.f32 %v375, 6.0
    %v504 = vmin.f32 %v376, 6.0
    %v505 = vmin.f32 %v377, 6.0
    %v506 = vmin.f32 %v378, 6.0
    %v507 = vmin.f32 %v379, 6.0
    %v508 = vmin.f32 %v380, 6.0
    %v509 = vmin.f32 %v381, 6.0
    %v510 = vmin.f32 %v382, 6.0
    %v511 = vmin.f32 %v383, 6.0
    %v512 = vmin.f32 %v384, 6.0
    %v513 = vmin.f32 %v385, 6.0
    %v514 = vmin.f32 %v386, 6.0
    %v515 = vmin.f32 %v387, 6.0
    %v516 = vmin.f32 %v388, 6.0
    %v517 = vmin.f32 %v389, 6.0
    %v518 = vmin.f32 %v390, 6.0
    %v519 = vmin.f32 %v391, 6.0
    %v520 = vmin.f32 %v392, 6.0
    %v521 = vmin.f32 %v393, 6.0
    %v522 = vmin.f32 %v394, 6.0
    %v523 = vmin.f32 %v395, 6.0
    %v524 = vmin.f32 %v396, 6.0
    %v525 = vmin.f32 %v397, 6.0
    %v526 = vmin.f32 %v398, 6.0
    %v527 = vmin.f32 %v399, 6.0
    %v528 = vmin.f32 %v400, 6.0
    %v529 = vmin.f32 %v401, 6.0
    %v530 = vmin.f32 %v402, 6.0
    %v531 = vmin.f32 %v403, 6.0
    %v532 = vmin.f32 %v404, 6.0
    %v533 = vmin.f32 %v405, 6.0
    %v534 = vmin.f32 %v406, 6.0
    %v535 = vrcp.pop 6.0
    %v536 = vmul.f32 %v407, %v535
    %v537 = vmul.f32 %v408, %v535
    %v538 = vmul.f32 %v409, %v535
    %v539 = vmul.f32 %v410, %v535
    %v540 = vmul.f32 %v411, %v535
    %v541 = vmul.f32 %v412, %v535
    %v542 = vmul.f32 %v413, %v535
    %v543 = vmul.f32 %v414, %v535
    %v544 = vmul.f32 %v415, %v535
    %v545 = vmul.f32 %v416, %v535
    %v546 = vmul.f32 %v417, %v535
    %v547 = vmul.f32 %v418, %v535
    %v548 = vmul.f32 %v419, %v535
    %v549 = vmul.f32 %v420, %v535
    %v550 = vmul.f32 %v421, %v535
    %v551 = vmul.f32 %v422, %v535
    %v552 = vmul.f32 %v423, %v535
    %v553 = vmul.f32 %v424, %v535
    %v554 = vmul.f32 %v425, %v535
    %v555 = vmul.f32 %v426, %v535
    %v556 = vmul.f32 %v427, %v535
    %v557 = vmul.f32 %v428, %v535
    %v558 = vmul.f32 %v429, %v535
    %v559 = vmul.f32 %v430, %v535
    %v560 = vmul.f32 %v431, %v535
    %v561 = vmul.f32 %v432, %v535
    %v562 = vmul.f32 %v433, %v535
    %v563 = vmul.f32 %v434, %v535
    %v564 = vmul.f32 %v435, %v535
    %v565 = vmul.f32 %v436, %v535
    %v566 = vmul.f32 %v437, %v535
    %v567 = vmul.f32 %v438, %v535
    %v568 = vmul.f32 %v439, %v535
    %v569 = vmul.f32 %v440, %v535
    %v570 = vmul.f32 %v441, %v535
    %v571 = vmul.f32 %v442, %v535
    %v572 = vmul.f32 %v443, %v535
    %v573 = vmul.f32 %v444, %v535
    %v574 = vmul.f32 %v445, %v535
    %v575 = vmul.f32 %v446, %v535
    %v576 = vmul.f32 %v447, %v535
    %v577 = vmul.f32 %v448, %v535
    %v578 = vmul.f32 %v449, %v535
    %v579 = vmul.f32 %v450, %v535
    %v580 = vmul.f32 %v451, %v535
    %v581 = vmul.f32 %v452, %v535
    %v582 = vmul.f32 %v453, %v535
    %v583 = vmul.f32 %v454, %v535
    %v584 = vmul.f32 %v455, %v535
    %v585 = vmul.f32 %v456, %v535
    %v586 = vmul.f32 %v457, %v535
    %v587 = vmul.f32 %v458, %v535
    %v588 = vmul.f32 %v459, %v535
    %v589 = vmul.f32 %v460, %v535
    %v590 = vmul.f32 %v461, %v535
    %v591 = vmul.f32 %v462, %v535
    %v592 = vmul.f32 %v463, %v535
    %v593 = vmul.f32 %v464, %v535
    %v594 = vmul.f32 %v465, %v535
    %v595 = vmul.f32 %v466, %v535
    %v596 = vmul.f32 %v467, %v535
    %v597 = vmul.f32 %v468, %v535
    %v598 = vmul.f32 %v469, %v535
    %v599 = vmul.f32 %v470, %v535
    %v600 = vmul.f32 %v471, %v535
    %v601 = vmul.f32 %v472, %v535
    %v602 = vmul.f32 %v473, %v535
    %v603 = vmul.f32 %v474, %v535
    %v604 = vmul.f32 %v475, %v535
    %v605 = vmul.f32 %v476, %v535
    %v606 = vmul.f32 %v477, %v535
    %v607 = vmul.f32 %v478, %v535
    %v608 = vmul.f32 %v479, %v535
    %v609 = vmul.f32 %v480, %v535
    %v610 = vmul.f32 %v481, %v535
    %v611 = vmul.f32 %v482, %v535
    %v612 = vmul.f32 %v483, %v535
    %v613 = vmul.f32 %v484, %v535
    %v614 = vmul.f32 %v485, %v535
    %v615 = vmul.f32 %v486, %v535
    %v616 = vmul.f32 %v487, %v535
    %v617 = vmul.f32 %v488, %v535
    %v618 = vmul.f32 %v489, %v535
    %v619 = vmul.f32 %v490, %v535
    %v620 = vmul.f32 %v491, %v535
    %v621 = vmul.f32 %v492, %v535
    %v622 = vmul.f32 %v493, %v535
    %v623 = vmul.f32 %v494, %v535
    %v624 = vmul.f32 %v495, %v535
    %v625 = vmul.f32 %v496, %v535
    %v626 = vmul.f32 %v497, %v535
    %v627 = vmul.f32 %v498, %v535
    %v628 = vmul.f32 %v499, %v535
    %v629 = vmul.f32 %v500, %v535
    %v630 = vmul.f32 %v501, %v535
    %v631 = vmul.f32 %v502, %v535
    %v632 = vmul.f32 %v503, %v535
    %v633 = vmul.f32 %v504, %v535
    %v634 = vmul.f32 %v505, %v535
    %v635 = vmul.f32 %v506, %v535
    %v636 = vmul.f32 %v507, %v535
    %v637 = vmul.f32 %v508, %v535
    %v638 = vmul.f32 %v509, %v535
    %v639 = vmul.f32 %v510, %v535
    %v640 = vmul.f32 %v511, %v535
    %v641 = vmul.f32 %v512, %v535
    %v642 = vmul.f32 %v513, %v535
    %v643 = vmul.f32 %v514, %v535
    %v644 = vmul.f32 %v515, %v535
    %v645 = vmul.f32 %v516, %v535
    %v646 = vmul.f32 %v517, %v535
    %v647 = vmul.f32 %v518, %v535
    %v648 = vmul.f32 %v519, %v535
    %v649 = vmul.f32 %v520, %v535
    %v650 = vmul.f32 %v521, %v535
    %v651 = vmul.f32 %v522, %v535
    %v652 = vmul.f32 %v523, %v535
    %v653 = vmul.f32 %v524, %v535
    %v654 = vmul.f32 %v525, %v535
    %v655 = vmul.f32 %v526, %v535
    %v656 = vmul.f32 %v527, %v535
    %v657 = vmul.f32 %v528, %v535
    %v658 = vmul.f32 %v529, %v535
    %v659 = vmul.f32 %v530, %v535
    %v660 = vmul.f32 %v531, %v535
    %v661 = vmul.f32 %v532, %v535
    %v662 = vmul.f32 %v533, %v535
    %v663 = vmul.f32 %v534, %v535
    %v664 = vmul.f32 %v23, %v536
    %v665 = vmul.f32 %v24, %v537
    %v666 = vmul.f32 %v25, %v538
    %v667 = vmul.f32 %v26, %v539
    %v668 = vmul.f32 %v27, %v540
    %v669 = vmul.f32 %v28, %v541
    %v670 = vmul.f32 %v29, %v542
    %v671 = vmul.f32 %v30, %v543
    %v672 = vmul.f32 %v31, %v544
    %v673 = vmul.f32 %v32, %v545
    %v674 = vmul.f32 %v33, %v546
    %v675 = vmul.f32 %v34, %v547
    %v676 = vmul.f32 %v35, %v548
    %v677 = vmul.f32 %v36, %v549
    %v678 = vmul.f32 %v37, %v550
    %v679 = vmul.f32 %v38, %v551
    %v680 = vmul.f32 %v39, %v552
    %v681 = vmul.f32 %v40, %v553
    %v682 = vmul.f32 %v41, %v554
    %v683 = vmul.f32 %v42, %v555
    %v684 = vmul.f32 %v43, %v556
    %v685 = vmul.f32 %v44, %v557
    %v686 = vmul.f32 %v45, %v558
    %v687 = vmul.f32 %v46, %v559
    %v688 = vmul.f32 %v47, %v560
    %v689 = vmul.f32 %v48, %v561
    %v690 = vmul.f32 %v49, %v562
    %v691 = vmul.f32 %v50, %v563
    %v692 = vmul.f32 %v51, %v564
    %v693 = vmul.f32 %v52, %v565
    %v694 = vmul.f32 %v53, %v566
    %v695 = vmul.f32 %v54, %v567
    %v696 = vmul.f32 %v55, %v568
    %v697 = vmul.f32 %v56, %v569
    %v698 = vmul.f32 %v57, %v570
    %v699 = vmul.f32 %v58, %v571
    %v700 = vmul.f32 %v59, %v572
    %v701 = vmul.f32 %v60, %v573
    %v702 = vmul.f32 %v61, %v574
    %v703 = vmul.f32 %v62, %v575
    %v704 = vmul.f32 %v63, %v576
    %v705 = vmul.f32 %v64, %v577
    %v706 = vmul.f32 %v65, %v578
    %v707 = vmul.f32 %v66, %v579
    %v708 = vmul.f32 %v67, %v580
    %v709 = vmul.f32 %v68, %v581
    %v710 = vmul.f32 %v69, %v582
    %v711 = vmul.f32 %v70, %v583
    %v712 = vmul.f32 %v71, %v584
    %v713 = vmul.f32 %v72, %v585
    %v714 = vmul.f32 %v73, %v586
    %v715 = vmul.f32 %v74, %v587
    %v716 = vmul.f32 %v75, %v588
    %v717 = vmul.f32 %v76, %v589
    %v718 = vmul.f32 %v77, %v590
    %v719 = vmul.f32 %v78, %v591
    %v720 = vmul.f32 %v79, %v592
    %v721 = vmul.f32 %v80, %v593
    %v722 = vmul.f32 %v81, %v594
    %v723 = vmul.f32 %v82, %v595
    %v724 = vmul.f32 %v83, %v596
    %v725 = vmul.f32 %v84, %v597
    %v726 = vmul.f32 %v85, %v598
    %v727 = vmul.f32 %v86, %v599
    %v728 = vmul.f32 %v87, %v600
    %v729 = vmul.f32 %v88, %v601
    %v730 = vmul.f32 %v89, %v602
    %v731 = vmul.f32 %v90, %v603
    %v732 = vmul.f32 %v91, %v604
    %v733 = vmul.f32 %v92, %v605
    %v734 = vmul.f32 %v93, %v606
    %v735 = vmul.f32 %v94, %v607
    %v736 = vmul.f32 %v95, %v608
    %v737 = vmul.f32 %v96, %v609
    %v738 = vmul.f32 %v97, %v610
    %v739 = vmul.f32 %v98, %v611
    %v740 = vmul.f32 %v99, %v612
    %v741 = vmul.f32 %v100, %v613
    %v742 = vmul.f32 %v101, %v614
    %v743 = vmul.f32 %v102, %v615
    %v744 = vmul.f32 %v103, %v616
    %v745 = vmul.f32 %v104, %v617
    %v746 = vmul.f32 %v105, %v618
    %v747 = vmul.f32 %v106, %v619
    %v748 = vmul.f32 %v107, %v620
    %v749 = vmul.f32 %v108, %v621
    %v750 = vmul.f32 %v109, %v622
    %v751 = vmul.f32 %v110, %v623
    %v752 = vmul.f32 %v111, %v624
    %v753 = vmul.f32 %v112, %v625
    %v754 = vmul.f32 %v113, %v626
    %v755 = vmul.f32 %v114, %v627
    %v756 = vmul.f32 %v115, %v628
    %v757 = vmul.f32 %v116, %v629
    %v758 = vmul.f32 %v117, %v630
    %v759 = vmul.f32 %v118, %v631
    %v760 = vmul.f32 %v119, %v632
    %v761 = vmul.f32 %v120, %v633
    %v762 = vmul.f32 %v121, %v634
    %v763 = vmul.f32 %v122, %v635
    %v764 = vmul.f32 %v123, %v636
    %v765 = vmul.f32 %v124, %v637
    %v766 = vmul.f32 %v125, %v638
    %v767 = vmul.f32 %v126, %v639
    %v768 = vmul.f32 %v127, %v640
    %v769 = vmul.f32 %v128, %v641
    %v770 = vmul.f32 %v129, %v642
    %v771 = vmul.f32 %v130, %v643
    %v772 = vmul.f32 %v131, %v644
    %v773 = vmul.f32 %v132, %v645
    %v774 = vmul.f32 %v133, %v646
    %v775 = vmul.f32 %v134, %v647
    %v776 = vmul.f32 %v135, %v648
    %v777 = vmul.f32 %v136, %v649
    %v778 = vmul.f32 %v137, %v650
    %v779 = vmul.f32 %v138, %v651
    %v780 = vmul.f32 %v139, %v652
    %v781 = vmul.f32 %v140, %v653
    %v782 = vmul.f32 %v141, %v654
    %v783 = vmul.f32 %v142, %v655
    %v784 = vmul.f32 %v143, %v656
    %v785 = vmul.f32 %v144, %v657
    %v786 = vmul.f32 %v145, %v658
    %v787 = vmul.f32 %v146, %v659
    %v788 = vmul.f32 %v147, %v660
    %v789 = vmul.f32 %v148, %v661
    %v790 = vmul.f32 %v149, %v662
    %v791 = vmul.f32 %v150, %v663
    %792 = vst [vmem:[#allocation5] sm:$0xff] %v664
    %793 = vst [vmem:[#allocation5 + $0x8] sm:$0xff] %v665
    %794 = vst [vmem:[#allocation5 + $0x10] sm:$0xff] %v666
    %795 = vst [vmem:[#allocation5 + $0x18] sm:$0xff] %v667
    %796 = vst [vmem:[#allocation5 + $0x20] sm:$0xff] %v668
    %797 = vst [vmem:[#allocation5 + $0x28] sm:$0xff] %v669
    %798 = vst [vmem:[#allocation5 + $0x30] sm:$0xff] %v670
    %799 = vst [vmem:[#allocation5 + $0x38] sm:$0xff] %v671
    %800 = vst [vmem:[#allocation5 + $0x40] sm:$0xff] %v672
    %801 = vst [vmem:[#allocation5 + $0x48] sm:$0xff] %v673
    %802 = vst [vmem:[#allocation5 + $0x50] sm:$0xff] %v674
    %803 = vst [vmem:[#allocation5 + $0x58] sm:$0xff] %v675
    %804 = vst [vmem:[#allocation5 + $0x60] sm:$0xff] %v676
    %805 = vst [vmem:[#allocation5 + $0x68] sm:$0xff] %v677
    %806 = vst [vmem:[#allocation5 + $0x70] sm:$0xff] %v678
    %807 = vst [vmem:[#allocation5 + $0x78] sm:$0xff] %v679
    %808 = vst [vmem:[#allocation5 + $0x80] sm:$0xff] %v680
    %809 = vst [vmem:[#allocation5 + $0x88] sm:$0xff] %v681
    %810 = vst [vmem:[#allocation5 + $0x90] sm:$0xff] %v682
    %811 = vst [vmem:[#allocation5 + $0x98] sm:$0xff] %v683
    %812 = vst [vmem:[#allocation5 + $0xa0] sm:$0xff] %v684
    %813 = vst [vmem:[#allocation5 + $0xa8] sm:$0xff] %v685
    %814 = vst [vmem:[#allocation5 + $0xb0] sm:$0xff] %v686
    %815 = vst [vmem:[#allocation5 + $0xb8] sm:$0xff] %v687
    %816 = vst [vmem:[#allocation5 + $0xc0] sm:$0xff] %v688
    %817 = vst [vmem:[#allocation5 + $0xc8] sm:$0xff] %v689
    %818 = vst [vmem:[#allocation5 + $0xd0] sm:$0xff] %v690
    %819 = vst [vmem:[#allocation5 + $0xd8] sm:$0xff] %v691
    %820 = vst [vmem:[#allocation5 + $0xe0] sm:$0xff] %v692
    %821 = vst [vmem:[#allocation5 + $0xe8] sm:$0xff] %v693
    %822 = vst [vmem:[#allocation5 + $0xf0] sm:$0xff] %v694
    %823 = vst [vmem:[#allocation5 + $0xf8] sm:$0xff] %v695
    %824 = vst [vmem:[#allocation5 + $0x100] sm:$0xff] %v696
    %825 = vst [vmem:[#allocation5 + $0x108] sm:$0xff] %v697
    %826 = vst [vmem:[#allocation5 + $0x110] sm:$0xff] %v698
    %827 = vst [vmem:[#allocation5 + $0x118] sm:$0xff] %v699
    %828 = vst [vmem:[#allocation5 + $0x120] sm:$0xff] %v700
    %829 = vst [vmem:[#allocation5 + $0x128] sm:$0xff] %v701
    %830 = vst [vmem:[#allocation5 + $0x130] sm:$0xff] %v702
    %831 = vst [vmem:[#allocation5 + $0x138] sm:$0xff] %v703
    %832 = vst [vmem:[#allocation5 + $0x140] sm:$0xff] %v704
    %833 = vst [vmem:[#allocation5 + $0x148] sm:$0xff] %v705
    %834 = vst [vmem:[#allocation5 + $0x150] sm:$0xff] %v706
    %835 = vst [vmem:[#allocation5 + $0x158] sm:$0xff] %v707
    %836 = vst [vmem:[#allocation5 + $0x160] sm:$0xff] %v708
    %837 = vst [vmem:[#allocation5 + $0x168] sm:$0xff] %v709
    %838 = vst [vmem:[#allocation5 + $0x170] sm:$0xff] %v710
    %839 = vst [vmem:[#allocation5 + $0x178] sm:$0xff] %v711
    %840 = vst [vmem:[#allocation5 + $0x180] sm:$0xff] %v712
    %841 = vst [vmem:[#allocation5 + $0x188] sm:$0xff] %v713
    %842 = vst [vmem:[#allocation5 + $0x190] sm:$0xff] %v714
    %843 = vst [vmem:[#allocation5 + $0x198] sm:$0xff] %v715
    %844 = vst [vmem:[#allocation5 + $0x1a0] sm:$0xff] %v716
    %845 = vst [vmem:[#allocation5 + $0x1a8] sm:$0xff] %v717
    %846 = vst [vmem:[#allocation5 + $0x1b0] sm:$0xff] %v718
    %847 = vst [vmem:[#allocation5 + $0x1b8] sm:$0xff] %v719
    %848 = vst [vmem:[#allocation5 + $0x1c0] sm:$0xff] %v720
    %849 = vst [vmem:[#allocation5 + $0x1c8] sm:$0xff] %v721
    %850 = vst [vmem:[#allocation5 + $0x1d0] sm:$0xff] %v722
    %851 = vst [vmem:[#allocation5 + $0x1d8] sm:$0xff] %v723
    %852 = vst [vmem:[#allocation5 + $0x1e0] sm:$0xff] %v724
    %853 = vst [vmem:[#allocation5 + $0x1e8] sm:$0xff] %v725
    %854 = vst [vmem:[#allocation5 + $0x1f0] sm:$0xff] %v726
    %855 = vst [vmem:[#allocation5 + $0x1f8] sm:$0xff] %v727
    %856 = vst [vmem:[#allocation5 + $0x200] sm:$0xff] %v728
    %857 = vst [vmem:[#allocation5 + $0x208] sm:$0xff] %v729
    %858 = vst [vmem:[#allocation5 + $0x210] sm:$0xff] %v730
    %859 = vst [vmem:[#allocation5 + $0x218] sm:$0xff] %v731
    %860 = vst [vmem:[#allocation5 + $0x220] sm:$0xff] %v732
    %861 = vst [vmem:[#allocation5 + $0x228] sm:$0xff] %v733
    %862 = vst [vmem:[#allocation5 + $0x230] sm:$0xff] %v734
    %863 = vst [vmem:[#allocation5 + $0x238] sm:$0xff] %v735
    %864 = vst [vmem:[#allocation5 + $0x240] sm:$0xff] %v736
    %865 = vst [vmem:[#allocation5 + $0x248] sm:$0xff] %v737
    %866 = vst [vmem:[#allocation5 + $0x250] sm:$0xff] %v738
    %867 = vst [vmem:[#allocation5 + $0x258] sm:$0xff] %v739
    %868 = vst [vmem:[#allocation5 + $0x260] sm:$0xff] %v740
    %869 = vst [vmem:[#allocation5 + $0x268] sm:$0xff] %v741
    %870 = vst [vmem:[#allocation5 + $0x270] sm:$0xff] %v742
    %871 = vst [vmem:[#allocation5 + $0x278] sm:$0xff] %v743
    %872 = vst [vmem:[#allocation5 + $0x280] sm:$0xff] %v744
    %873 = vst [vmem:[#allocation5 + $0x288] sm:$0xff] %v745
    %874 = vst [vmem:[#allocation5 + $0x290] sm:$0xff] %v746
    %875 = vst [vmem:[#allocation5 + $0x298] sm:$0xff] %v747
    %876 = vst [vmem:[#allocation5 + $0x2a0] sm:$0xff] %v748
    %877 = vst [vmem:[#allocation5 + $0x2a8] sm:$0xff] %v749
    %878 = vst [vmem:[#allocation5 + $0x2b0] sm:$0xff] %v750
    %879 = vst [vmem:[#allocation5 + $0x2b8] sm:$0xff] %v751
    %880 = vst [vmem:[#allocation5 + $0x2c0] sm:$0xff] %v752
    %881 = vst [vmem:[#allocation5 + $0x2c8] sm:$0xff] %v753
    %882 = vst [vmem:[#allocation5 + $0x2d0] sm:$0xff] %v754
    %883 = vst [vmem:[#allocation5 + $0x2d8] sm:$0xff] %v755
    %884 = vst [vmem:[#allocation5 + $0x2e0] sm:$0xff] %v756
    %885 = vst [vmem:[#allocation5 + $0x2e8] sm:$0xff] %v757
    %886 = vst [vmem:[#allocation5 + $0x2f0] sm:$0xff] %v758
    %887 = vst [vmem:[#allocation5 + $0x2f8] sm:$0xff] %v759
    %888 = vst [vmem:[#allocation5 + $0x300] sm:$0xff] %v760
    %889 = vst [vmem:[#allocation5 + $0x308] sm:$0xff] %v761
    %890 = vst [vmem:[#allocation5 + $0x310] sm:$0xff] %v762
    %891 = vst [vmem:[#allocation5 + $0x318] sm:$0xff] %v763
    %892 = vst [vmem:[#allocation5 + $0x320] sm:$0xff] %v764
    %893 = vst [vmem:[#allocation5 + $0x328] sm:$0xff] %v765
    %894 = vst [vmem:[#allocation5 + $0x330] sm:$0xff] %v766
    %895 = vst [vmem:[#allocation5 + $0x338] sm:$0xff] %v767
    %896 = vst [vmem:[#allocation5 + $0x340] sm:$0xff] %v768
    %897 = vst [vmem:[#allocation5 + $0x348] sm:$0xff] %v769
    %898 = vst [vmem:[#allocation5 + $0x350] sm:$0xff] %v770
    %899 = vst [vmem:[#allocation5 + $0x358] sm:$0xff] %v771
    %900 = vst [vmem:[#allocation5 + $0x360] sm:$0xff] %v772
    %901 = vst [vmem:[#allocation5 + $0x368] sm:$0xff] %v773
    %902 = vst [vmem:[#allocation5 + $0x370] sm:$0xff] %v774
    %903 = vst [vmem:[#allocation5 + $0x378] sm:$0xff] %v775
    %904 = vst [vmem:[#allocation5 + $0x380] sm:$0xff] %v776
    %905 = vst [vmem:[#allocation5 + $0x388] sm:$0xff] %v777
    %906 = vst [vmem:[#allocation5 + $0x390] sm:$0xff] %v778
    %907 = vst [vmem:[#allocation5 + $0x398] sm:$0xff] %v779
    %908 = vst [vmem:[#allocation5 + $0x3a0] sm:$0xff] %v780
    %909 = vst [vmem:[#allocation5 + $0x3a8] sm:$0xff] %v781
    %910 = vst [vmem:[#allocation5 + $0x3b0] sm:$0xff] %v782
    %911 = vst [vmem:[#allocation5 + $0x3b8] sm:$0xff] %v783
    %912 = vst [vmem:[#allocation5 + $0x3c0] sm:$0xff] %v784
    %913 = vst [vmem:[#allocation5 + $0x3c8] sm:$0xff] %v785
    %914 = vst [vmem:[#allocation5 + $0x3d0] sm:$0xff] %v786
    %915 = vst [vmem:[#allocation5 + $0x3d8] sm:$0xff] %v787
    %916 = vst [vmem:[#allocation5 + $0x3e0] sm:$0xff] %v788
    %917 = vst [vmem:[#allocation5 + $0x3e8] sm:$0xff] %v789
    %918 = vst [vmem:[#allocation5 + $0x3f0] sm:$0xff] %v790
    %919 = vst [vmem:[#allocation5 + $0x3f8] sm:$0xff] %v791
    // Predicated region
    $region10: #{tpu_custom_call.1} parent=1 // pred_check
      _
    $region11: #{tpu_custom_call.1} parent=1 // pred_check_branch
      %921 = sbr.rel (0) target = $region13
    $region12: #{tpu_custom_call.1} parent=1 // pred_region
      %s923 = ssub.s32 16384, 16384
      %924 = vsyncadd [#allocation4], %s923
      %s925 = sshll.u32 [#allocation5], 4
      %s926 = int_to_ptr.vmem [resolvable:$true] %s925
      %931 = dma.vmem_to_hbm [thread:$0]  %s926, 16384, %s1, [#allocation4], 4096, 4096, 256
    $region13: #{tpu_custom_call.1} parent=1 // pred_fallthru
      _
    // Predicated region
    $region14: #{tpu_custom_call.1} parent=1 // pred_check
      _
    $region15: #{tpu_custom_call.1} parent=1 // pred_check_branch
      %933 = sbr.rel (0) target = $region17
    $region16: #{tpu_custom_call.1} parent=1 // pred_region
      %934 = dma.done [#allocation4], 16384
    $region17: #{tpu_custom_call.1} parent=1 // pred_fallthru
      _
    %935 = vsyncpa [#allocation3], 1
    %936 = vsyncpa [#allocation4], 1

</llo_original>
